<compile_context>
chip_gen: v6e
topology: v6e:2x2x1
jax: 0.10.0
libtpu: 0.0.40
codegen_flags: <defaults>
</compile_context>

<pallas_src>
import functools

import jax
import jax.numpy as jnp
from jax.experimental import pallas as pl
from jax.experimental.pallas import tpu as pltpu

_LANES = 128
_VMEM_SPEC = pl.BlockSpec(memory_space=pltpu.MemorySpace.VMEM)


# ----------------------------------------------------------------------------
# Pallas kernel (fully fused forward)
# ----------------------------------------------------------------------------
def _gat_layer(h_in, wprime, bias, adj, edge_bool, *, num_heads, out_channels,
               concat, apply_elu, approx_recip):
    """One GATConv layer, all heads, value-in / value-out (no stores)."""
    H, C = num_heads, out_channels
    bf16, f32 = jnp.bfloat16, jnp.float32

    # Single fused MXU pass: projection [N, H*C] + attention scores [N, 2H].
    hs = jnp.dot(h_in.astype(bf16), wprime.astype(bf16),
                 preferred_element_type=f32)                  # [N, H*C + 2H]
    h = hs[:, :H * C]                                         # projected features
    s = hs[:, H * C:]                                         # [N, 2H] scores
    s_src_t = s[:, :H].T                                      # [H, N] (one transpose)

    h_bf = h.astype(bf16)                                     # cast once, reuse per head
    neg_inf = f32(-1e30)

    head_outs = []
    for head in range(H):
        # e[i, j] = LeakyReLU(att_dst.h_i + att_src.h_j), slope 0.2
        e = s[:, H + head:H + head + 1] + s_src_t[head:head + 1, :]   # [N, N]
        e = jnp.maximum(e, 0.2 * e)                                   # LeakyReLU
        e = jnp.where(edge_bool, e, neg_inf)

        # Row-wise softmax over incoming edges of each target node;
        # adj carries edge multiplicity (duplicate edges count separately).
        m = jnp.max(e, axis=1, keepdims=True)
        p = jnp.exp(e - m) * adj
        denom = jnp.sum(p, axis=1, keepdims=True)
        if approx_recip:
            alpha = p * pl.reciprocal(denom, approx=True)
        else:
            alpha = p / denom                                          # exact (output layer)

        hh = h_bf[:, head * C:(head + 1) * C]                          # [N, C] static slice
        head_outs.append(jnp.dot(alpha.astype(bf16), hh,
                                 preferred_element_type=f32))          # [N, C]

    if concat:
        agg = jnp.concatenate(head_outs, axis=1)                       # [N, H*C]
    else:
        agg = head_outs[0]
        for contrib in head_outs[1:]:
            agg = agg + contrib
        agg = agg * (1.0 / f32(H))

    out = agg + bias
    if apply_elu:
        out = jnp.where(out > 0, out, jnp.exp(jnp.minimum(out, 0.0)) - 1.0)
    return out


def fused_gat_kernel(x_ref, adj_ref, slab_ref, out_ref, *, layer_defs, ca_row,
                     n, num_classes):
    """Whole GAT forward: stacked GATConv layers + class-attn scale + log_softmax.

    layer_defs: tuple of (H, C, concat, apply_elu, in_dim, w_row, b_row, approx)
    slab_ref:   [rows, 128] packed parameters (W', bias per layer, class_attn).
    """
    adj = adj_ref[...]           # [N, N] float edge multiplicities (incl. self loops)
    edge_bool = adj > 0.0        # computed once, reused by every layer / head
    slab = slab_ref[...]         # one DMA for all small parameters

    h = x_ref[...]
    for (H, C, concat, apply_elu, in_dim, w_row, b_row, approx) in layer_defs:
        wprime = slab[w_row:w_row + in_dim, :H * C + 2 * H]
        bias = slab[b_row:b_row + 1, :(H * C if concat else C)]
        h = _gat_layer(h, wprime, bias, adj, edge_bool,
                       num_heads=H, out_channels=C, concat=concat,
                       apply_elu=apply_elu, approx_recip=approx)

    # x = x * class_attention; log_softmax(dim=1)
    ca = slab[ca_row:ca_row + n, 0:1]                    # [N, 1]
    z = h * ca
    m = jnp.max(z, axis=1, keepdims=True)
    z = z - m
    lse = jnp.log(jnp.sum(jnp.exp(z), axis=1, keepdims=True))
    logp = z - lse                                       # [N, K]

    # Lane-dense store: pad class dim to 128 lanes, single unmasked vst.
    pad = jnp.zeros((n, _LANES - num_classes), jnp.float32)
    out_ref[...] = jnp.concatenate([logp, pad], axis=1)


# ----------------------------------------------------------------------------
# Wrapper (pallas_call glue)
# ----------------------------------------------------------------------------
def pack_attention(asrc, adst):
    """Block-diagonal [H*C, 2H] packing so h @ a_pack yields all per-head
    source scores (cols :H) and target scores (cols H:) in one MXU pass."""
    H, C = asrc.shape
    eye = jnp.eye(H, dtype=jnp.float32)
    src_blk = (asrc[:, :, None] * eye[:, None, :]).reshape(H * C, H)
    dst_blk = (adst[:, :, None] * eye[:, None, :]).reshape(H * C, H)
    return jnp.concatenate([src_blk, dst_blk], axis=1)   # [H*C, 2H]


def _round8(r):
    return -(-r // 8) * 8


def gat_forward(params, x, edge_index, y, *, hid, in_head, out_head, num_classes):
    n = x.shape[0]
    adj = dense_adj_with_self_loops(edge_index, n)
    class_attn = params["class_attention_weights"][y].reshape(-1, 1)  # [N, 1]

    layer_specs = []
    for (w, asrc, adst, b) in params["hidden_layers"]:
        layer_specs.append((w, asrc, adst, b, in_head, hid, True, True, True))
    w, asrc, adst, b = params["out_layer"]
    layer_specs.append((w, asrc, adst, b, out_head, num_classes, False, False, False))

    # Pack every small parameter into one lane-padded [rows, 128] slab.
    segments, layer_defs, row = [], [], 0
    for (w, asrc, adst, b, H, C, concat, elu, approx) in layer_specs:
        a_pack = pack_attention(asrc, adst)
        # Fold score matmul into the projection: W' = [W | W @ a_pack].
        wprime = jnp.concatenate([w, w @ a_pack], axis=1)   # [in_dim, H*C + 2H]
        in_dim = w.shape[0]
        w_row = row
        segments.append(jnp.pad(wprime, ((0, _round8(in_dim) - in_dim),
                                         (0, _LANES - wprime.shape[1]))))
        row += _round8(in_dim)
        b_row = row
        segments.append(jnp.pad(b, ((0, 7), (0, _LANES - b.shape[1]))))
        row += 8
        layer_defs.append((H, C, concat, elu, in_dim, w_row, b_row, approx))
    ca_row = row
    segments.append(jnp.pad(class_attn, ((0, _round8(n) - n), (0, _LANES - 1))))
    row += _round8(n)
    slab = jnp.concatenate(segments, axis=0)                # [rows, 128] f32

    kernel = functools.partial(fused_gat_kernel, layer_defs=tuple(layer_defs),
                               ca_row=ca_row, n=n, num_classes=num_classes)
    out_padded = pl.pallas_call(
        kernel,
        out_shape=jax.ShapeDtypeStruct((n, _LANES), jnp.float32),
        in_specs=[_VMEM_SPEC, _VMEM_SPEC, _VMEM_SPEC],
        out_specs=_VMEM_SPEC,
    )(x, adj, slab)
    return out_padded[:, :num_classes]


# ----------------------------------------------------------------------------
# Model setup (plain JAX glue)
# ----------------------------------------------------------------------------
def dense_adj_with_self_loops(edge_index, n):
    """adj[i, j] = multiplicity of edge j -> i; self loops set to exactly 1
    (PyG GATConv: remove_self_loops + add_self_loops)."""
    src, dst = edge_index[0], edge_index[1]
    adj = jnp.zeros((n, n), jnp.float32).at[dst, src].add(1.0)
    diag = jnp.arange(n)
    adj = adj.at[diag, diag].set(1.0)
    return adj


def _glorot(key, shape):
    fan_in, fan_out = shape[-2], shape[-1]
    limit = jnp.sqrt(6.0 / (fan_in + fan_out))
    return jax.random.uniform(key, shape, jnp.float32, -limit, limit)


def init_params(key, num_features, num_classes, num_hidden_layers=1,
                hid=12, in_head=3, out_head=3):
    params = {"hidden_layers": [], "out_layer": None}
    in_dim = num_features
    for _ in range(num_hidden_layers):
        key, kw, ks, kd = jax.random.split(key, 4)
        w = _glorot(kw, (in_dim, in_head * hid))
        asrc = _glorot(ks, (in_head, hid))
        adst = _glorot(kd, (in_head, hid))
        b = jnp.zeros((1, in_head * hid), jnp.float32)
        params["hidden_layers"].append((w, asrc, adst, b))
        in_dim = in_head * hid
    key, kw, ks, kd = jax.random.split(key, 4)
    w = _glorot(kw, (in_dim, out_head * num_classes))
    asrc = _glorot(ks, (out_head, num_classes))
    adst = _glorot(kd, (out_head, num_classes))
    b = jnp.zeros((1, num_classes), jnp.float32)
    params["out_layer"] = (w, asrc, adst, b)
    # torch.nn.Parameter(torch.ones(num_classes, 1))
    params["class_attention_weights"] = jnp.ones((num_classes, 1), jnp.float32)
    return params


# ----------------------------------------------------------------------------
# Main
# ----------------------------------------------------------------------------
if __name__ == "__main__":
    key = jax.random.PRNGKey(0)
    N, num_features, num_classes = 16, 8, 4
    hid, in_head, out_head = 12, 3, 3

    kx, ks, kd, ky, kp = jax.random.split(key, 5)
    x = jax.random.normal(kx, (N, num_features), jnp.float32)

    # deterministic random graph: 32 random directed edges + a ring
    rand_src = jax.random.randint(ks, (32,), 0, N)
    rand_dst = jax.random.randint(kd, (32,), 0, N)
    ring_src = jnp.arange(N)
    ring_dst = (jnp.arange(N) + 1) % N
    edge_index = jnp.stack([jnp.concatenate([rand_src, ring_src]),
                            jnp.concatenate([rand_dst, ring_dst])]).astype(jnp.int32)

    y = jax.random.randint(ky, (N,), 0, num_classes)

    params = init_params(kp, num_features, num_classes,
                         num_hidden_layers=1, hid=hid,
                         in_head=in_head, out_head=out_head)

    out = gat_forward(params, x, edge_index, y,
                      hid=hid, in_head=in_head, out_head=out_head,
                      num_classes=num_classes)
    jax.block_until_ready(out)
    assert out.shape == (N, num_classes)
    assert bool(jnp.all(jnp.isfinite(out)))
    # log_softmax rows must exponentiate to ~1 (final normalization is exact).
    assert bool(jnp.allclose(jnp.sum(jnp.exp(out), axis=1), 1.0, atol=1e-3))
    print("KERNEL_OK")
</pallas_src>

<mosaic_0001>
module attributes {stable_mosaic.version = 11 : i64} {
  func.func @fused_gat_kernel(%arg0: memref<16x8xf32, #tpu.memory_space<vmem>>, %arg1: memref<16x16xf32, #tpu.memory_space<vmem>>, %arg2: memref<80x128xf32, #tpu.memory_space<vmem>>, %arg3: memref<16x128xf32, #tpu.memory_space<vmem>>) attributes {dimension_semantics = [], scalar_prefetch = 0 : i64, scratch_operands = 0 : i64, tpu.core_type = #tpu.core_type<tc>} {
    %c0 = arith.constant 0 : index
    %c0_0 = arith.constant 0 : index
    %0 = vector.load %arg1[%c0, %c0_0] : memref<16x16xf32, #tpu.memory_space<vmem>>, vector<16x16xf32>
    %cst = arith.constant 0.000000e+00 : f32
    %1 = vector.broadcast %cst : f32 to vector<16x16xf32>
    %2 = arith.cmpf ogt, %0, %1 : vector<16x16xf32>
    %c0_1 = arith.constant 0 : index
    %c0_2 = arith.constant 0 : index
    %3 = vector.load %arg2[%c0_1, %c0_2] : memref<80x128xf32, #tpu.memory_space<vmem>>, vector<80x128xf32>
    %c0_3 = arith.constant 0 : index
    %c0_4 = arith.constant 0 : index
    %4 = vector.load %arg0[%c0_3, %c0_4] : memref<16x8xf32, #tpu.memory_space<vmem>>, vector<16x8xf32>
    %5 = vector.extract_strided_slice %3 {offsets = [0, 0], sizes = [8, 42], strides = [1, 1]} : vector<80x128xf32> to vector<8x42xf32>
    %6 = vector.extract_strided_slice %3 {offsets = [8, 0], sizes = [1, 36], strides = [1, 1]} : vector<80x128xf32> to vector<1x36xf32>
    %7 = arith.truncf %4 : vector<16x8xf32> to vector<16x8xbf16>
    %8 = arith.truncf %5 : vector<8x42xf32> to vector<8x42xbf16>
    %cst_5 = arith.constant dense<0.000000e+00> : vector<16x42xf32>
    %9 = tpu.matmul %7, %8, %cst_5 {dimension_numbers = #tpu.dot_dimension_numbers<[1], [0], [0], [1], [0, 0, 1, 1], [], []>} : vector<16x8xbf16>, vector<8x42xbf16>, vector<16x42xf32> -> vector<16x42xf32>
    %10 = vector.extract_strided_slice %9 {offsets = [0, 0], sizes = [16, 36], strides = [1, 1]} : vector<16x42xf32> to vector<16x36xf32>
    %11 = vector.extract_strided_slice %9 {offsets = [0, 36], sizes = [16, 6], strides = [1, 1]} : vector<16x42xf32> to vector<16x6xf32>
    %12 = vector.extract_strided_slice %11 {offsets = [0, 0], sizes = [16, 3], strides = [1, 1]} : vector<16x6xf32> to vector<16x3xf32>
    %13 = tpu.transpose %12, [1, 0] : vector<16x3xf32> -> vector<3x16xf32>
    %14 = arith.truncf %10 : vector<16x36xf32> to vector<16x36xbf16>
    %15 = vector.extract_strided_slice %11 {offsets = [0, 3], sizes = [16, 1], strides = [1, 1]} : vector<16x6xf32> to vector<16x1xf32>
    %16 = vector.extract_strided_slice %13 {offsets = [0, 0], sizes = [1, 16], strides = [1, 1]} : vector<3x16xf32> to vector<1x16xf32>
    %17 = vector.broadcast %15 : vector<16x1xf32> to vector<16x16xf32>
    %18 = vector.broadcast %16 : vector<1x16xf32> to vector<16x16xf32>
    %19 = arith.addf %17, %18 : vector<16x16xf32>
    %cst_6 = arith.constant 2.000000e-01 : f32
    %20 = vector.broadcast %cst_6 : f32 to vector<16x16xf32>
    %21 = arith.mulf %20, %19 : vector<16x16xf32>
    %22 = arith.maximumf %19, %21 : vector<16x16xf32>
    %cst_7 = arith.constant -1.000000e+30 : f32
    %23 = vector.broadcast %cst_7 : f32 to vector<16x16xf32>
    %24 = arith.select %2, %22, %23 : vector<16x16xi1>, vector<16x16xf32>
    %cst_8 = arith.constant dense<0xFF800000> : vector<16xf32>
    %25 = vector.multi_reduction <maximumf>, %24, %cst_8 [1] : vector<16x16xf32> to vector<16xf32>
    %26 = vector.shape_cast %25 : vector<16xf32> to vector<16x1xf32>
    %27 = vector.broadcast %26 : vector<16x1xf32> to vector<16x16xf32>
    %28 = arith.subf %24, %27 : vector<16x16xf32>
    %29 = math.exp %28 : vector<16x16xf32>
    %30 = arith.mulf %29, %0 : vector<16x16xf32>
    %cst_9 = arith.constant dense<0.000000e+00> : vector<16xf32>
    %31 = vector.multi_reduction <add>, %30, %cst_9 [1] : vector<16x16xf32> to vector<16xf32>
    %32 = vector.shape_cast %31 : vector<16xf32> to vector<16x1xf32>
    %33 = tpu.reciprocal %32 {approx = true} : vector<16x1xf32> -> vector<16x1xf32>
    %34 = vector.broadcast %33 : vector<16x1xf32> to vector<16x16xf32>
    %35 = arith.mulf %30, %34 : vector<16x16xf32>
    %36 = vector.extract_strided_slice %14 {offsets = [0, 0], sizes = [16, 12], strides = [1, 1]} : vector<16x36xbf16> to vector<16x12xbf16>
    %37 = arith.truncf %35 : vector<16x16xf32> to vector<16x16xbf16>
    %cst_10 = arith.constant dense<0.000000e+00> : vector<16x12xf32>
    %38 = tpu.matmul %37, %36, %cst_10 {dimension_numbers = #tpu.dot_dimension_numbers<[1], [0], [0], [1], [0, 0, 1, 1], [], []>} : vector<16x16xbf16>, vector<16x12xbf16>, vector<16x12xf32> -> vector<16x12xf32>
    %39 = vector.extract_strided_slice %11 {offsets = [0, 4], sizes = [16, 1], strides = [1, 1]} : vector<16x6xf32> to vector<16x1xf32>
    %40 = vector.extract_strided_slice %13 {offsets = [1, 0], sizes = [1, 16], strides = [1, 1]} : vector<3x16xf32> to vector<1x16xf32>
    %41 = vector.broadcast %39 : vector<16x1xf32> to vector<16x16xf32>
    %42 = vector.broadcast %40 : vector<1x16xf32> to vector<16x16xf32>
    %43 = arith.addf %41, %42 : vector<16x16xf32>
    %cst_11 = arith.constant 2.000000e-01 : f32
    %44 = vector.broadcast %cst_11 : f32 to vector<16x16xf32>
    %45 = arith.mulf %44, %43 : vector<16x16xf32>
    %46 = arith.maximumf %43, %45 : vector<16x16xf32>
    %cst_12 = arith.constant -1.000000e+30 : f32
    %47 = vector.broadcast %cst_12 : f32 to vector<16x16xf32>
    %48 = arith.select %2, %46, %47 : vector<16x16xi1>, vector<16x16xf32>
    %cst_13 = arith.constant dense<0xFF800000> : vector<16xf32>
    %49 = vector.multi_reduction <maximumf>, %48, %cst_13 [1] : vector<16x16xf32> to vector<16xf32>
    %50 = vector.shape_cast %49 : vector<16xf32> to vector<16x1xf32>
    %51 = vector.broadcast %50 : vector<16x1xf32> to vector<16x16xf32>
    %52 = arith.subf %48, %51 : vector<16x16xf32>
    %53 = math.exp %52 : vector<16x16xf32>
    %54 = arith.mulf %53, %0 : vector<16x16xf32>
    %cst_14 = arith.constant dense<0.000000e+00> : vector<16xf32>
    %55 = vector.multi_reduction <add>, %54, %cst_14 [1] : vector<16x16xf32> to vector<16xf32>
    %56 = vector.shape_cast %55 : vector<16xf32> to vector<16x1xf32>
    %57 = tpu.reciprocal %56 {approx = true} : vector<16x1xf32> -> vector<16x1xf32>
    %58 = vector.broadcast %57 : vector<16x1xf32> to vector<16x16xf32>
    %59 = arith.mulf %54, %58 : vector<16x16xf32>
    %60 = vector.extract_strided_slice %14 {offsets = [0, 12], sizes = [16, 12], strides = [1, 1]} : vector<16x36xbf16> to vector<16x12xbf16>
    %61 = arith.truncf %59 : vector<16x16xf32> to vector<16x16xbf16>
    %cst_15 = arith.constant dense<0.000000e+00> : vector<16x12xf32>
    %62 = tpu.matmul %61, %60, %cst_15 {dimension_numbers = #tpu.dot_dimension_numbers<[1], [0], [0], [1], [0, 0, 1, 1], [], []>} : vector<16x16xbf16>, vector<16x12xbf16>, vector<16x12xf32> -> vector<16x12xf32>
    %63 = vector.extract_strided_slice %11 {offsets = [0, 5], sizes = [16, 1], strides = [1, 1]} : vector<16x6xf32> to vector<16x1xf32>
    %64 = vector.extract_strided_slice %13 {offsets = [2, 0], sizes = [1, 16], strides = [1, 1]} : vector<3x16xf32> to vector<1x16xf32>
    %65 = vector.broadcast %63 : vector<16x1xf32> to vector<16x16xf32>
    %66 = vector.broadcast %64 : vector<1x16xf32> to vector<16x16xf32>
    %67 = arith.addf %65, %66 : vector<16x16xf32>
    %cst_16 = arith.constant 2.000000e-01 : f32
    %68 = vector.broadcast %cst_16 : f32 to vector<16x16xf32>
    %69 = arith.mulf %68, %67 : vector<16x16xf32>
    %70 = arith.maximumf %67, %69 : vector<16x16xf32>
    %cst_17 = arith.constant -1.000000e+30 : f32
    %71 = vector.broadcast %cst_17 : f32 to vector<16x16xf32>
    %72 = arith.select %2, %70, %71 : vector<16x16xi1>, vector<16x16xf32>
    %cst_18 = arith.constant dense<0xFF800000> : vector<16xf32>
    %73 = vector.multi_reduction <maximumf>, %72, %cst_18 [1] : vector<16x16xf32> to vector<16xf32>
    %74 = vector.shape_cast %73 : vector<16xf32> to vector<16x1xf32>
    %75 = vector.broadcast %74 : vector<16x1xf32> to vector<16x16xf32>
    %76 = arith.subf %72, %75 : vector<16x16xf32>
    %77 = math.exp %76 : vector<16x16xf32>
    %78 = arith.mulf %77, %0 : vector<16x16xf32>
    %cst_19 = arith.constant dense<0.000000e+00> : vector<16xf32>
    %79 = vector.multi_reduction <add>, %78, %cst_19 [1] : vector<16x16xf32> to vector<16xf32>
    %80 = vector.shape_cast %79 : vector<16xf32> to vector<16x1xf32>
    %81 = tpu.reciprocal %80 {approx = true} : vector<16x1xf32> -> vector<16x1xf32>
    %82 = vector.broadcast %81 : vector<16x1xf32> to vector<16x16xf32>
    %83 = arith.mulf %78, %82 : vector<16x16xf32>
    %84 = vector.extract_strided_slice %14 {offsets = [0, 24], sizes = [16, 12], strides = [1, 1]} : vector<16x36xbf16> to vector<16x12xbf16>
    %85 = arith.truncf %83 : vector<16x16xf32> to vector<16x16xbf16>
    %cst_20 = arith.constant dense<0.000000e+00> : vector<16x12xf32>
    %86 = tpu.matmul %85, %84, %cst_20 {dimension_numbers = #tpu.dot_dimension_numbers<[1], [0], [0], [1], [0, 0, 1, 1], [], []>} : vector<16x16xbf16>, vector<16x12xbf16>, vector<16x12xf32> -> vector<16x12xf32>
    %87 = tpu.concatenate %38, %62, %86 in 1 : vector<16x12xf32>, vector<16x12xf32>, vector<16x12xf32> -> vector<16x36xf32>
    %88 = vector.broadcast %6 : vector<1x36xf32> to vector<16x36xf32>
    %89 = arith.addf %87, %88 : vector<16x36xf32>
    %cst_21 = arith.constant 0.000000e+00 : f32
    %90 = vector.broadcast %cst_21 : f32 to vector<16x36xf32>
    %91 = arith.cmpf ogt, %89, %90 : vector<16x36xf32>
    %cst_22 = arith.constant 0.000000e+00 : f32
    %92 = vector.broadcast %cst_22 : f32 to vector<16x36xf32>
    %93 = arith.minimumf %89, %92 : vector<16x36xf32>
    %94 = math.exp %93 : vector<16x36xf32>
    %cst_23 = arith.constant 1.000000e+00 : f32
    %95 = vector.broadcast %cst_23 : f32 to vector<16x36xf32>
    %96 = arith.subf %94, %95 : vector<16x36xf32>
    %97 = arith.select %91, %89, %96 : vector<16x36xi1>, vector<16x36xf32>
    %98 = vector.extract_strided_slice %3 {offsets = [16, 0], sizes = [36, 18], strides = [1, 1]} : vector<80x128xf32> to vector<36x18xf32>
    %99 = vector.extract_strided_slice %3 {offsets = [56, 0], sizes = [1, 4], strides = [1, 1]} : vector<80x128xf32> to vector<1x4xf32>
    %100 = arith.truncf %97 : vector<16x36xf32> to vector<16x36xbf16>
    %101 = arith.truncf %98 : vector<36x18xf32> to vector<36x18xbf16>
    %cst_24 = arith.constant dense<0.000000e+00> : vector<16x18xf32>
    %102 = tpu.matmul %100, %101, %cst_24 {dimension_numbers = #tpu.dot_dimension_numbers<[1], [0], [0], [1], [0, 0, 1, 1], [], []>} : vector<16x36xbf16>, vector<36x18xbf16>, vector<16x18xf32> -> vector<16x18xf32>
    %103 = vector.extract_strided_slice %102 {offsets = [0, 0], sizes = [16, 12], strides = [1, 1]} : vector<16x18xf32> to vector<16x12xf32>
    %104 = vector.extract_strided_slice %102 {offsets = [0, 12], sizes = [16, 6], strides = [1, 1]} : vector<16x18xf32> to vector<16x6xf32>
    %105 = vector.extract_strided_slice %104 {offsets = [0, 0], sizes = [16, 3], strides = [1, 1]} : vector<16x6xf32> to vector<16x3xf32>
    %106 = tpu.transpose %105, [1, 0] : vector<16x3xf32> -> vector<3x16xf32>
    %107 = arith.truncf %103 : vector<16x12xf32> to vector<16x12xbf16>
    %108 = vector.extract_strided_slice %104 {offsets = [0, 3], sizes = [16, 1], strides = [1, 1]} : vector<16x6xf32> to vector<16x1xf32>
    %109 = vector.extract_strided_slice %106 {offsets = [0, 0], sizes = [1, 16], strides = [1, 1]} : vector<3x16xf32> to vector<1x16xf32>
    %110 = vector.broadcast %108 : vector<16x1xf32> to vector<16x16xf32>
    %111 = vector.broadcast %109 : vector<1x16xf32> to vector<16x16xf32>
    %112 = arith.addf %110, %111 : vector<16x16xf32>
    %cst_25 = arith.constant 2.000000e-01 : f32
    %113 = vector.broadcast %cst_25 : f32 to vector<16x16xf32>
    %114 = arith.mulf %113, %112 : vector<16x16xf32>
    %115 = arith.maximumf %112, %114 : vector<16x16xf32>
    %cst_26 = arith.constant -1.000000e+30 : f32
    %116 = vector.broadcast %cst_26 : f32 to vector<16x16xf32>
    %117 = arith.select %2, %115, %116 : vector<16x16xi1>, vector<16x16xf32>
    %cst_27 = arith.constant dense<0xFF800000> : vector<16xf32>
    %118 = vector.multi_reduction <maximumf>, %117, %cst_27 [1] : vector<16x16xf32> to vector<16xf32>
    %119 = vector.shape_cast %118 : vector<16xf32> to vector<16x1xf32>
    %120 = vector.broadcast %119 : vector<16x1xf32> to vector<16x16xf32>
    %121 = arith.subf %117, %120 : vector<16x16xf32>
    %122 = math.exp %121 : vector<16x16xf32>
    %123 = arith.mulf %122, %0 : vector<16x16xf32>
    %cst_28 = arith.constant dense<0.000000e+00> : vector<16xf32>
    %124 = vector.multi_reduction <add>, %123, %cst_28 [1] : vector<16x16xf32> to vector<16xf32>
    %125 = vector.shape_cast %124 : vector<16xf32> to vector<16x1xf32>
    %126 = vector.broadcast %125 : vector<16x1xf32> to vector<16x16xf32>
    %127 = arith.divf %123, %126 : vector<16x16xf32>
    %128 = vector.extract_strided_slice %107 {offsets = [0, 0], sizes = [16, 4], strides = [1, 1]} : vector<16x12xbf16> to vector<16x4xbf16>
    %129 = arith.truncf %127 : vector<16x16xf32> to vector<16x16xbf16>
    %cst_29 = arith.constant dense<0.000000e+00> : vector<16x4xf32>
    %130 = tpu.matmul %129, %128, %cst_29 {dimension_numbers = #tpu.dot_dimension_numbers<[1], [0], [0], [1], [0, 0, 1, 1], [], []>} : vector<16x16xbf16>, vector<16x4xbf16>, vector<16x4xf32> -> vector<16x4xf32>
    %131 = vector.extract_strided_slice %104 {offsets = [0, 4], sizes = [16, 1], strides = [1, 1]} : vector<16x6xf32> to vector<16x1xf32>
    %132 = vector.extract_strided_slice %106 {offsets = [1, 0], sizes = [1, 16], strides = [1, 1]} : vector<3x16xf32> to vector<1x16xf32>
    %133 = vector.broadcast %131 : vector<16x1xf32> to vector<16x16xf32>
    %134 = vector.broadcast %132 : vector<1x16xf32> to vector<16x16xf32>
    %135 = arith.addf %133, %134 : vector<16x16xf32>
    %cst_30 = arith.constant 2.000000e-01 : f32
    %136 = vector.broadcast %cst_30 : f32 to vector<16x16xf32>
    %137 = arith.mulf %136, %135 : vector<16x16xf32>
    %138 = arith.maximumf %135, %137 : vector<16x16xf32>
    %cst_31 = arith.constant -1.000000e+30 : f32
    %139 = vector.broadcast %cst_31 : f32 to vector<16x16xf32>
    %140 = arith.select %2, %138, %139 : vector<16x16xi1>, vector<16x16xf32>
    %cst_32 = arith.constant dense<0xFF800000> : vector<16xf32>
    %141 = vector.multi_reduction <maximumf>, %140, %cst_32 [1] : vector<16x16xf32> to vector<16xf32>
    %142 = vector.shape_cast %141 : vector<16xf32> to vector<16x1xf32>
    %143 = vector.broadcast %142 : vector<16x1xf32> to vector<16x16xf32>
    %144 = arith.subf %140, %143 : vector<16x16xf32>
    %145 = math.exp %144 : vector<16x16xf32>
    %146 = arith.mulf %145, %0 : vector<16x16xf32>
    %cst_33 = arith.constant dense<0.000000e+00> : vector<16xf32>
    %147 = vector.multi_reduction <add>, %146, %cst_33 [1] : vector<16x16xf32> to vector<16xf32>
    %148 = vector.shape_cast %147 : vector<16xf32> to vector<16x1xf32>
    %149 = vector.broadcast %148 : vector<16x1xf32> to vector<16x16xf32>
    %150 = arith.divf %146, %149 : vector<16x16xf32>
    %151 = vector.extract_strided_slice %107 {offsets = [0, 4], sizes = [16, 4], strides = [1, 1]} : vector<16x12xbf16> to vector<16x4xbf16>
    %152 = arith.truncf %150 : vector<16x16xf32> to vector<16x16xbf16>
    %cst_34 = arith.constant dense<0.000000e+00> : vector<16x4xf32>
    %153 = tpu.matmul %152, %151, %cst_34 {dimension_numbers = #tpu.dot_dimension_numbers<[1], [0], [0], [1], [0, 0, 1, 1], [], []>} : vector<16x16xbf16>, vector<16x4xbf16>, vector<16x4xf32> -> vector<16x4xf32>
    %154 = vector.extract_strided_slice %104 {offsets = [0, 5], sizes = [16, 1], strides = [1, 1]} : vector<16x6xf32> to vector<16x1xf32>
    %155 = vector.extract_strided_slice %106 {offsets = [2, 0], sizes = [1, 16], strides = [1, 1]} : vector<3x16xf32> to vector<1x16xf32>
    %156 = vector.broadcast %154 : vector<16x1xf32> to vector<16x16xf32>
    %157 = vector.broadcast %155 : vector<1x16xf32> to vector<16x16xf32>
    %158 = arith.addf %156, %157 : vector<16x16xf32>
    %cst_35 = arith.constant 2.000000e-01 : f32
    %159 = vector.broadcast %cst_35 : f32 to vector<16x16xf32>
    %160 = arith.mulf %159, %158 : vector<16x16xf32>
    %161 = arith.maximumf %158, %160 : vector<16x16xf32>
    %cst_36 = arith.constant -1.000000e+30 : f32
    %162 = vector.broadcast %cst_36 : f32 to vector<16x16xf32>
    %163 = arith.select %2, %161, %162 : vector<16x16xi1>, vector<16x16xf32>
    %cst_37 = arith.constant dense<0xFF800000> : vector<16xf32>
    %164 = vector.multi_reduction <maximumf>, %163, %cst_37 [1] : vector<16x16xf32> to vector<16xf32>
    %165 = vector.shape_cast %164 : vector<16xf32> to vector<16x1xf32>
    %166 = vector.broadcast %165 : vector<16x1xf32> to vector<16x16xf32>
    %167 = arith.subf %163, %166 : vector<16x16xf32>
    %168 = math.exp %167 : vector<16x16xf32>
    %169 = arith.mulf %168, %0 : vector<16x16xf32>
    %cst_38 = arith.constant dense<0.000000e+00> : vector<16xf32>
    %170 = vector.multi_reduction <add>, %169, %cst_38 [1] : vector<16x16xf32> to vector<16xf32>
    %171 = vector.shape_cast %170 : vector<16xf32> to vector<16x1xf32>
    %172 = vector.broadcast %171 : vector<16x1xf32> to vector<16x16xf32>
    %173 = arith.divf %169, %172 : vector<16x16xf32>
    %174 = vector.extract_strided_slice %107 {offsets = [0, 8], sizes = [16, 4], strides = [1, 1]} : vector<16x12xbf16> to vector<16x4xbf16>
    %175 = arith.truncf %173 : vector<16x16xf32> to vector<16x16xbf16>
    %cst_39 = arith.constant dense<0.000000e+00> : vector<16x4xf32>
    %176 = tpu.matmul %175, %174, %cst_39 {dimension_numbers = #tpu.dot_dimension_numbers<[1], [0], [0], [1], [0, 0, 1, 1], [], []>} : vector<16x16xbf16>, vector<16x4xbf16>, vector<16x4xf32> -> vector<16x4xf32>
    %177 = arith.addf %130, %153 : vector<16x4xf32>
    %178 = arith.addf %177, %176 : vector<16x4xf32>
    %cst_40 = arith.constant 1.000000e+00 : f32
    %cst_41 = arith.constant 3.000000e+00 : f32
    %179 = arith.divf %cst_40, %cst_41 : f32
    %180 = vector.broadcast %179 : f32 to vector<16x4xf32>
    %181 = arith.mulf %178, %180 : vector<16x4xf32>
    %182 = vector.broadcast %99 : vector<1x4xf32> to vector<16x4xf32>
    %183 = arith.addf %181, %182 : vector<16x4xf32>
    %184 = vector.extract_strided_slice %3 {offsets = [64, 0], sizes = [16, 1], strides = [1, 1]} : vector<80x128xf32> to vector<16x1xf32>
    %185 = vector.broadcast %184 : vector<16x1xf32> to vector<16x4xf32>
    %186 = arith.mulf %183, %185 : vector<16x4xf32>
    %cst_42 = arith.constant dense<0xFF800000> : vector<16xf32>
    %187 = vector.multi_reduction <maximumf>, %186, %cst_42 [1] : vector<16x4xf32> to vector<16xf32>
    %188 = vector.shape_cast %187 : vector<16xf32> to vector<16x1xf32>
    %189 = vector.broadcast %188 : vector<16x1xf32> to vector<16x4xf32>
    %190 = arith.subf %186, %189 : vector<16x4xf32>
    %191 = math.exp %190 : vector<16x4xf32>
    %cst_43 = arith.constant dense<0.000000e+00> : vector<16xf32>
    %192 = vector.multi_reduction <add>, %191, %cst_43 [1] : vector<16x4xf32> to vector<16xf32>
    %193 = vector.shape_cast %192 : vector<16xf32> to vector<16x1xf32>
    %194 = math.log %193 : vector<16x1xf32>
    %195 = vector.broadcast %194 : vector<16x1xf32> to vector<16x4xf32>
    %196 = arith.subf %190, %195 : vector<16x4xf32>
    %cst_44 = arith.constant 0.000000e+00 : f32
    %197 = vector.broadcast %cst_44 : f32 to vector<16x124xf32>
    %198 = tpu.concatenate %196, %197 in 1 : vector<16x4xf32>, vector<16x124xf32> -> vector<16x128xf32>
    %c0_45 = arith.constant 0 : index
    %c0_46 = arith.constant 0 : index
    %199 = vector.load %arg3[%c0_45, %c0_46] : memref<16x128xf32, #tpu.memory_space<vmem>>, vector<16x128xf32>
    tpu.vector_store %arg3[%c0_45, %c0_46], %198 {strides = array<i32>} : memref<16x128xf32, #tpu.memory_space<vmem>>, vector<16x128xf32>,
    return
  }
}

</mosaic_0001>

<llo_original>
// kernel: tpu_custom_call.1
$region0: #{tpu_custom_call.1}
  #allocation0 [shape = 'u32[]', space=smem, size = 0x4, offset = 0x4, fixed_abs, tag = 'smem constant byte address 0x4 - core index']
  #allocation1 [shape = 'u32[144,128]{1,0:T(1,128)}', space=vmem, size = 0x12000, scoped, tag = 'internal scratch']
  %s0 = inlined_call_operand.vmem [shape: f32[16,8], index: 0, kind: input, shape index: {}]
  %s1 = inlined_call_operand.vmem [shape: f32[16,16], index: 1, kind: input, shape index: {}]
  %s2 = inlined_call_operand.hbm [shape: f32[80,128], index: 2, kind: input, shape index: {}]
  %s3 = inlined_call_operand.hbm [shape: f32[16,128], index: 3, kind: output, shape index: {}]
  %s4 = sld [smem:[#allocation0]]
  $region26: #{tpu_custom_call.1} parent=0
    _
  %s6 = ssub.s32 1, %s4
  %s7 = scalar_select 0, %s6, %s4
  $region1: #{tpu_custom_call.1} parent=0
    #allocation2 [shape = 'u8[40960]{0}', space=vmem, size = 0xa000, scoped, tag = 'input window, operand 2, single buffered']
    #allocation3 [shape = 's32[1]{0}', space=sflag, size = 0x4, scoped, tag = 'scoped memory for tpu_custom_call.1']
    #allocation4 [shape = 's32[1]{0}', space=sflag, size = 0x4, scoped, tag = 'scoped memory for tpu_custom_call.1']
    #allocation5 [shape = 'u8[8192]{0}', space=vmem, size = 0x2000, scoped, tag = 'output window, operand 0, single buffered']
    %8 = vsyncpa [#allocation3], 0
    %9 = vsyncpa [#allocation4], 0
    // Predicated region
    $region2: #{tpu_custom_call.1} parent=1 // pred_check
      _
    $region3: #{tpu_custom_call.1} parent=1 // pred_check_branch
      %11 = sbr.rel (0) target = $region5
    $region4: #{tpu_custom_call.1} parent=1 // pred_region
      _
    $region5: #{tpu_custom_call.1} parent=1 // pred_fallthru
      _
    // Predicated region
    $region6: #{tpu_custom_call.1} parent=1 // pred_check
      _
    $region7: #{tpu_custom_call.1} parent=1 // pred_check_branch
      %13 = sbr.rel (0) target = $region9
    $region8: #{tpu_custom_call.1} parent=1 // pred_region
      _
    $region9: #{tpu_custom_call.1} parent=1 // pred_fallthru
      _
    // Predicated region
    $region10: #{tpu_custom_call.1} parent=1 // pred_check
      _
    $region11: #{tpu_custom_call.1} parent=1 // pred_check_branch
      %15 = sbr.rel (0) target = $region13
    $region12: #{tpu_custom_call.1} parent=1 // pred_region
      %s17 = ssub.s32 1280, 1280
      %18 = vsyncadd [#allocation3], %s17
      %s19 = sshll.u32 [#allocation2], 4
      %s20 = int_to_ptr.vmem [resolvable:$true] %s19
      %25 = dma.hbm_to_vmem [thread:$0]  %s2, 1280, %s20, [#allocation3], 128, 128, 8
    $region13: #{tpu_custom_call.1} parent=1 // pred_fallthru
      _
    // Predicated region
    $region14: #{tpu_custom_call.1} parent=1 // pred_check
      _
    $region15: #{tpu_custom_call.1} parent=1 // pred_check_branch
      %27 = sbr.rel (0) target = $region17
    $region16: #{tpu_custom_call.1} parent=1 // pred_region
      %28 = dma.done [#allocation3], 1280
    $region17: #{tpu_custom_call.1} parent=1 // pred_fallthru
      _
    %v30 = vld [vmem:[%s1] sm:$0xff]
    %v31 = vld [vmem:[%s1 + $0x8] sm:$0xff]
    %vm32 = vcmp.gt.f32.partialorder %v30, 0.0
    %vm33 = vcmp.gt.f32.partialorder %v31, 0.0
    %v34 = vld [vmem:[#allocation2] sm:$0xff]
    %v35 = vld [vmem:[#allocation2 + $0x8] sm:$0xff]
    %v36 = vld [vmem:[#allocation2 + $0x10] sm:$0xff]
    %v37 = vld [vmem:[#allocation2 + $0x18] sm:$0xff]
    %v38 = vld [vmem:[#allocation2 + $0x20] sm:$0xff]
    %v39 = vld [vmem:[#allocation2 + $0x28] sm:$0xff]
    %v40 = vld [vmem:[#allocation2 + $0x30] sm:$0xff]
    %v41 = vld [vmem:[#allocation2 + $0x38] sm:$0xff]
    %v42 = vld [vmem:[#allocation2 + $0x40] sm:$0xff]
    %v43 = vld [vmem:[#allocation2 + $0x48] sm:$0xff]
    %v44 = vld [vmem:[%s0] sm:$0xff]
    %v45 = vld [vmem:[%s0 + $0x8] sm:$0xff]
    %v46 = vpack.c.bf16 %v45, %v44
    %v47 = vpack.c.bf16 %v34, %v34
    %vm48 = vcmask 64512
    %v50 = vsel %vm48, %v46, 0
    %vm52 = vcmask 1043456
    %v54 = vsel %vm52, %v47, 0
    %56 = vmatprep.subr.bf16.mxu0 0
    %57 = vmatpush1.bf16.msra.mxu0 0
    %58 = vmatprep.subr.bf16.mxu0 0
    %59 = vmatpush1.bf16.msra.mxu0 0
    %60 = vmatprep.subr.bf16.mxu0 0
    %61 = vmatpush1.bf16.msra.mxu0 0
    %62 = vmatprep.subr.bf16.mxu0 0
    %63 = vmatpush1.bf16.msra.mxu0 0
    %64 = vmatprep.subr.bf16.mxu0 0
    %65 = vmatpush1.bf16.msra.mxu0 0
    %66 = vmatprep.subr.bf16.mxu0 0
    %67 = vmatpush1.bf16.msra.mxu0 0
    %68 = vmatprep.subr.bf16.mxu0 0
    %69 = vmatpush1.bf16.msra.mxu0 0
    %70 = vmatprep.subr.bf16.mxu0 0
    %71 = vmatpush1.bf16.msra.mxu0 %v54
    %72 = vmatprep.subr.bf16.mxu0 0
    %73 = vmatpush2.bf16.msra.mxu0 0
    %74 = vmatprep.subr.bf16.mxu0 0
    %75 = vmatpush2.bf16.msra.mxu0 0
    %76 = vmatprep.subr.bf16.mxu0 0
    %77 = vmatpush2.bf16.msra.mxu0 0
    %78 = vmatprep.subr.bf16.mxu0 0
    %79 = vmatpush2.bf16.msra.mxu0 0
    %80 = vmatprep.subr.bf16.mxu0 0
    %81 = vmatpush2.bf16.msra.mxu0 0
    %82 = vmatprep.subr.bf16.mxu0 0
    %83 = vmatpush2.bf16.msra.mxu0 0
    %84 = vmatprep.subr.bf16.mxu0 0
    %85 = vmatpush2.bf16.msra.mxu0 0
    %86 = vmatprep.subr.bf16.mxu0 0
    %87 = vmatpush2.bf16.msra.mxu0 0
    %88 = vmatprep.mubr.bf16.mxu0 0
    %89 = vmatmul.mubr.bf16.gmra.mxu0 %v50
    %v90 = vpop.f32.mrf.mxu0
    %v91 = vadd.f32 0.0, %v90
    %v92 = vpop.f32.mrf.mxu0
    %v93 = vpop.f32.mrf.mxu0
    %v94 = vadd.f32 0.0, %v93
    %v95 = vpop.f32.mrf.mxu0
    %96 = vdwg.mxu0
    %99 = vrot.lane.b32.xlu0 %v91, 92
    %v100 = vpop.permute.xlu0 %99
    %101 = vrot.lane.b32.xlu0 %v94, 92
    %v102 = vpop.permute.xlu0 %101
    %105 = vxpose.xlu0.b32.start [1/16] %v100, 128
    %106 = vxpose.xlu0.b32.cont [2/16] %v102, 128
    %107 = vxpose.xlu0.b32.cont [3/16] 0.0, 128
    %108 = vxpose.xlu0.b32.cont [4/16] 0.0, 128
    %109 = vxpose.xlu0.b32.cont [5/16] 0.0, 128
    %110 = vxpose.xlu0.b32.cont [6/16] 0.0, 128
    %111 = vxpose.xlu0.b32.cont [7/16] 0.0, 128
    %112 = vxpose.xlu0.b32.cont [8/16] 0.0, 128
    %113 = vxpose.xlu0.b32.cont [9/16] 0.0, 128
    %114 = vxpose.xlu0.b32.cont [10/16] 0.0, 128
    %115 = vxpose.xlu0.b32.cont [11/16] 0.0, 128
    %116 = vxpose.xlu0.b32.cont [12/16] 0.0, 128
    %117 = vxpose.xlu0.b32.cont [13/16] 0.0, 128
    %118 = vxpose.xlu0.b32.cont [14/16] 0.0, 128
    %119 = vxpose.xlu0.b32.cont [15/16] 0.0, 128
    %120 = vxpose.xlu0.b32.end [16/16] 0.0, 128
    %v121 = vpop.trf.xlu0
    %v122 = vpop.trf.xlu0
    %v123 = vpop.trf.xlu0
    %v124 = vpop.trf.xlu0
    %v125 = vpop.trf.xlu0
    %v126 = vpop.trf.xlu0
    %v127 = vpop.trf.xlu0
    %v128 = vpop.trf.xlu0
    %v129 = vpop.trf.xlu0
    %v130 = vpop.trf.xlu0
    %v131 = vpop.trf.xlu0
    %v132 = vpop.trf.xlu0
    %v133 = vpop.trf.xlu0
    %v134 = vpop.trf.xlu0
    %v135 = vpop.trf.xlu0
    %v136 = vpop.trf.xlu0
    %v137 = vpack.c.bf16 %v94, %v91
    %138 = vset.pattern.permute.xlu0 39
    %139 = vperm.xlu0 %138, %v91
    %v140 = vpop.permute.xlu0 %139
    %142 = vset.pattern.permute.xlu0 39
    %143 = vperm.xlu0 %142, %v94
    %v144 = vpop.permute.xlu0 %143
    %v146 = vlaneseq
    %v147 = vshrl.u32 %v146, 7
    %v148 = vsub.s32 0, %v147
    %v149 = vrot.slane %v121, %v148
    %v150 = vadd.f32 %v140, %v149
    %v151 = vadd.f32 %v144, %v149
    %v152 = vmul.f32 %v150, 0.2
    %v153 = vmul.f32 %v151, 0.2
    %v154 = vmax.f32 %v150, %v152
    %v155 = vmax.f32 %v151, %v153
    %v156 = vsel %vm32, %v154, -1e+30
    %v157 = vsel %vm33, %v155, -1e+30
    %vm158 = vcmask 130048
    %v159 = vsel %vm158, %v156, -inf
    %160 = vmax.xlane.f32.xlu0 %v159
    %v161 = vpop.xlane.xlu0 %160
    %v162 = vsel %vm158, %v157, -inf
    %163 = vmax.xlane.f32.xlu0 %v162
    %v164 = vpop.xlane.xlu0 %163
    %v165 = vsub.f32 %v156, %v161
    %v166 = vsub.f32 %v157, %v164
    %v167 = vmul.f32 %v165, 1.442695
    %v168 = vpow.pop %v167
    %v169 = vmul.f32 %v166, 1.442695
    %v170 = vpow.pop %v169
    %v171 = vmul.f32 %v168, %v30
    %v172 = vmul.f32 %v170, %v31
    %v173 = vsel %vm158, %v171, 0.0
    %174 = vadd.xlane.f32.xlu0 %v173
    %v175 = vpop.xlane.xlu0 %174
    %v176 = vsel %vm158, %v172, 0.0
    %177 = vadd.xlane.f32.xlu0 %v176
    %v178 = vpop.xlane.xlu0 %177
    %v179 = vrcp.pop %v175
    %v180 = vrcp.pop %v178
    %v181 = vmul.f32 %v171, %v179
    %v182 = vmul.f32 %v172, %v180
    %v183 = vpack.c.bf16 %v182, %v181
    %v185 = vsel %vm158, %v183, 0
    %187 = vmatprep.subr.bf16.mxu0 0
    %188 = vmatpush1.bf16.msra.mxu0 0
    %189 = vmatprep.subr.bf16.mxu0 0
    %190 = vmatpush1.bf16.msra.mxu0 0
    %191 = vmatprep.subr.bf16.mxu0 0
    %192 = vmatpush1.bf16.msra.mxu0 0
    %193 = vmatprep.subr.bf16.mxu0 0
    %194 = vmatpush1.bf16.msra.mxu0 0
    %195 = vmatprep.subr.bf16.mxu0 0
    %196 = vmatpush1.bf16.msra.mxu0 0
    %197 = vmatprep.subr.bf16.mxu0 0
    %198 = vmatpush1.bf16.msra.mxu0 0
    %199 = vmatprep.subr.bf16.mxu0 0
    %200 = vmatpush1.bf16.msra.mxu0 0
    %201 = vmatprep.subr.bf16.mxu0 0
    %202 = vmatpush1.bf16.msra.mxu0 %v137
    %203 = vmatprep.subr.bf16.mxu0 0
    %204 = vmatpush2.bf16.msra.mxu0 0
    %205 = vmatprep.subr.bf16.mxu0 0
    %206 = vmatpush2.bf16.msra.mxu0 0
    %207 = vmatprep.subr.bf16.mxu0 0
    %208 = vmatpush2.bf16.msra.mxu0 0
    %209 = vmatprep.subr.bf16.mxu0 0
    %210 = vmatpush2.bf16.msra.mxu0 0
    %211 = vmatprep.subr.bf16.mxu0 0
    %212 = vmatpush2.bf16.msra.mxu0 0
    %213 = vmatprep.subr.bf16.mxu0 0
    %214 = vmatpush2.bf16.msra.mxu0 0
    %215 = vmatprep.subr.bf16.mxu0 0
    %216 = vmatpush2.bf16.msra.mxu0 0
    %217 = vmatprep.subr.bf16.mxu0 0
    %218 = vmatpush2.bf16.msra.mxu0 0
    %219 = vmatprep.mubr.bf16.mxu0 0
    %220 = vmatmul.mubr.bf16.gmra.mxu0 %v185
    %v221 = vpop.f32.mrf.mxu0
    %v222 = vadd.f32 0.0, %v221
    %v223 = vpop.f32.mrf.mxu0
    %v224 = vpop.f32.mrf.mxu0
    %v225 = vadd.f32 0.0, %v224
    %v226 = vpop.f32.mrf.mxu0
    %227 = vdwg.mxu0
    %228 = vset.pattern.permute.xlu0 40
    %229 = vperm.xlu0 %228, %v91
    %v230 = vpop.permute.xlu0 %229
    %232 = vset.pattern.permute.xlu0 40
    %233 = vperm.xlu0 %232, %v94
    %v234 = vpop.permute.xlu0 %233
    %v236 = vlaneseq
    %v237 = vshrl.u32 %v236, 7
    %v238 = vsub.s32 1, %v237
    %v239 = vrot.slane %v121, %v238
    %v240 = vadd.f32 %v230, %v239
    %v241 = vadd.f32 %v234, %v239
    %v242 = vmul.f32 %v240, 0.2
    %v243 = vmul.f32 %v241, 0.2
    %v244 = vmax.f32 %v240, %v242
    %v245 = vmax.f32 %v241, %v243
    %v246 = vsel %vm32, %v244, -1e+30
    %v247 = vsel %vm33, %v245, -1e+30
    %v248 = vsel %vm158, %v246, -inf
    %249 = vmax.xlane.f32.xlu0 %v248
    %v250 = vpop.xlane.xlu0 %249
    %v251 = vsel %vm158, %v247, -inf
    %252 = vmax.xlane.f32.xlu0 %v251
    %v253 = vpop.xlane.xlu0 %252
    %v254 = vsub.f32 %v246, %v250
    %v255 = vsub.f32 %v247, %v253
    %v256 = vmul.f32 %v254, 1.442695
    %v257 = vpow.pop %v256
    %v258 = vmul.f32 %v255, 1.442695
    %v259 = vpow.pop %v258
    %v260 = vmul.f32 %v257, %v30
    %v261 = vmul.f32 %v259, %v31
    %v262 = vsel %vm158, %v260, 0.0
    %263 = vadd.xlane.f32.xlu0 %v262
    %v264 = vpop.xlane.xlu0 %263
    %v265 = vsel %vm158, %v261, 0.0
    %266 = vadd.xlane.f32.xlu0 %v265
    %v267 = vpop.xlane.xlu0 %266
    %v268 = vrcp.pop %v264
    %v269 = vrcp.pop %v267
    %v270 = vmul.f32 %v260, %v268
    %v271 = vmul.f32 %v261, %v269
    %v272 = vpack.c.bf16 %v271, %v270
    %274 = vrot.lane.b32.xlu0 %v137, 116
    %v275 = vpop.permute.xlu0 %274
    %v278 = vsel %vm158, %v272, 0
    %280 = vmatprep.subr.bf16.mxu0 0
    %281 = vmatpush1.bf16.msra.mxu0 0
    %282 = vmatprep.subr.bf16.mxu0 0
    %283 = vmatpush1.bf16.msra.mxu0 0
    %284 = vmatprep.subr.bf16.mxu0 0
    %285 = vmatpush1.bf16.msra.mxu0 0
    %286 = vmatprep.subr.bf16.mxu0 0
    %287 = vmatpush1.bf16.msra.mxu0 0
    %288 = vmatprep.subr.bf16.mxu0 0
    %289 = vmatpush1.bf16.msra.mxu0 0
    %290 = vmatprep.subr.bf16.mxu0 0
    %291 = vmatpush1.bf16.msra.mxu0 0
    %292 = vmatprep.subr.bf16.mxu0 0
    %293 = vmatpush1.bf16.msra.mxu0 0
    %294 = vmatprep.subr.bf16.mxu0 0
    %295 = vmatpush1.bf16.msra.mxu0 %v275
    %296 = vmatprep.subr.bf16.mxu0 0
    %297 = vmatpush2.bf16.msra.mxu0 0
    %298 = vmatprep.subr.bf16.mxu0 0
    %299 = vmatpush2.bf16.msra.mxu0 0
    %300 = vmatprep.subr.bf16.mxu0 0
    %301 = vmatpush2.bf16.msra.mxu0 0
    %302 = vmatprep.subr.bf16.mxu0 0
    %303 = vmatpush2.bf16.msra.mxu0 0
    %304 = vmatprep.subr.bf16.mxu0 0
    %305 = vmatpush2.bf16.msra.mxu0 0
    %306 = vmatprep.subr.bf16.mxu0 0
    %307 = vmatpush2.bf16.msra.mxu0 0
    %308 = vmatprep.subr.bf16.mxu0 0
    %309 = vmatpush2.bf16.msra.mxu0 0
    %310 = vmatprep.subr.bf16.mxu0 0
    %311 = vmatpush2.bf16.msra.mxu0 0
    %312 = vmatprep.mubr.bf16.mxu0 0
    %313 = vmatmul.mubr.bf16.gmra.mxu0 %v278
    %v314 = vpop.f32.mrf.mxu0
    %v315 = vadd.f32 0.0, %v314
    %v316 = vpop.f32.mrf.mxu0
    %v317 = vpop.f32.mrf.mxu0
    %v318 = vadd.f32 0.0, %v317
    %v319 = vpop.f32.mrf.mxu0
    %320 = vdwg.mxu0
    %321 = vset.pattern.permute.xlu0 41
    %322 = vperm.xlu0 %321, %v91
    %v323 = vpop.permute.xlu0 %322
    %325 = vset.pattern.permute.xlu0 41
    %326 = vperm.xlu0 %325, %v94
    %v327 = vpop.permute.xlu0 %326
    %v329 = vlaneseq
    %v330 = vshrl.u32 %v329, 7
    %v331 = vsub.s32 2, %v330
    %v332 = vrot.slane %v121, %v331
    %v333 = vadd.f32 %v323, %v332
    %v334 = vadd.f32 %v327, %v332
    %v335 = vmul.f32 %v333, 0.2
    %v336 = vmul.f32 %v334, 0.2
    %v337 = vmax.f32 %v333, %v335
    %v338 = vmax.f32 %v334, %v336
    %v339 = vsel %vm32, %v337, -1e+30
    %v340 = vsel %vm33, %v338, -1e+30
    %v341 = vsel %vm158, %v339, -inf
    %342 = vmax.xlane.f32.xlu0 %v341
    %v343 = vpop.xlane.xlu0 %342
    %v344 = vsel %vm158, %v340, -inf
    %345 = vmax.xlane.f32.xlu0 %v344
    %v346 = vpop.xlane.xlu0 %345
    %v347 = vsub.f32 %v339, %v343
    %v348 = vsub.f32 %v340, %v346
    %v349 = vmul.f32 %v347, 1.442695
    %v350 = vpow.pop %v349
    %v351 = vmul.f32 %v348, 1.442695
    %v352 = vpow.pop %v351
    %v353 = vmul.f32 %v350, %v30
    %v354 = vmul.f32 %v352, %v31
    %v355 = vsel %vm158, %v353, 0.0
    %356 = vadd.xlane.f32.xlu0 %v355
    %v357 = vpop.xlane.xlu0 %356
    %v358 = vsel %vm158, %v354, 0.0
    %359 = vadd.xlane.f32.xlu0 %v358
    %v360 = vpop.xlane.xlu0 %359
    %v361 = vrcp.pop %v357
    %v362 = vrcp.pop %v360
    %v363 = vmul.f32 %v353, %v361
    %v364 = vmul.f32 %v354, %v362
    %v365 = vpack.c.bf16 %v364, %v363
    %366 = vrot.lane.b32.xlu0 %v137, 104
    %v367 = vpop.permute.xlu0 %366
    %v370 = vsel %vm158, %v365, 0
    %372 = vmatprep.subr.bf16.mxu0 0
    %373 = vmatpush1.bf16.msra.mxu0 0
    %374 = vmatprep.subr.bf16.mxu0 0
    %375 = vmatpush1.bf16.msra.mxu0 0
    %376 = vmatprep.subr.bf16.mxu0 0
    %377 = vmatpush1.bf16.msra.mxu0 0
    %378 = vmatprep.subr.bf16.mxu0 0
    %379 = vmatpush1.bf16.msra.mxu0 0
    %380 = vmatprep.subr.bf16.mxu0 0
    %381 = vmatpush1.bf16.msra.mxu0 0
    %382 = vmatprep.subr.bf16.mxu0 0
    %383 = vmatpush1.bf16.msra.mxu0 0
    %384 = vmatprep.subr.bf16.mxu0 0
    %385 = vmatpush1.bf16.msra.mxu0 0
    %386 = vmatprep.subr.bf16.mxu0 0
    %387 = vmatpush1.bf16.msra.mxu0 %v367
    %388 = vmatprep.subr.bf16.mxu0 0
    %389 = vmatpush2.bf16.msra.mxu0 0
    %390 = vmatprep.subr.bf16.mxu0 0
    %391 = vmatpush2.bf16.msra.mxu0 0
    %392 = vmatprep.subr.bf16.mxu0 0
    %393 = vmatpush2.bf16.msra.mxu0 0
    %394 = vmatprep.subr.bf16.mxu0 0
    %395 = vmatpush2.bf16.msra.mxu0 0
    %396 = vmatprep.subr.bf16.mxu0 0
    %397 = vmatpush2.bf16.msra.mxu0 0
    %398 = vmatprep.subr.bf16.mxu0 0
    %399 = vmatpush2.bf16.msra.mxu0 0
    %400 = vmatprep.subr.bf16.mxu0 0
    %401 = vmatpush2.bf16.msra.mxu0 0
    %402 = vmatprep.subr.bf16.mxu0 0
    %403 = vmatpush2.bf16.msra.mxu0 0
    %404 = vmatprep.mubr.bf16.mxu0 0
    %405 = vmatmul.mubr.bf16.gmra.mxu0 %v370
    %v406 = vpop.f32.mrf.mxu0
    %v407 = vadd.f32 0.0, %v406
    %v408 = vpop.f32.mrf.mxu0
    %v409 = vpop.f32.mrf.mxu0
    %v410 = vadd.f32 0.0, %v409
    %v411 = vpop.f32.mrf.mxu0
    %412 = vdwg.mxu0
    %415 = vrot.lane.b32.xlu0 %v315, 12
    %v416 = vpop.permute.xlu0 %415
    %417 = vrot.lane.b32.xlu0 %v318, 12
    %v418 = vpop.permute.xlu0 %417
    %423 = vrot.lane.b32.xlu0 %v407, 24
    %v424 = vpop.permute.xlu0 %423
    %425 = vrot.lane.b32.xlu0 %v410, 24
    %v426 = vpop.permute.xlu0 %425
    %vm429 = vcmask 97280
    %v430 = vsel %vm429, %v222, %v416
    %v431 = vsel %vm429, %v225, %v418
    %vm432 = vcmask 195584
    %v433 = vsel %vm432, %v430, %v424
    %v434 = vsel %vm432, %v431, %v426
    %v435 = vlaneseq
    %v436 = vshrl.u32 %v435, 7
    %v437 = vsub.s32 0, %v436
    %v438 = vrot.slane %v35, %v437
    %v439 = vadd.f32 %v433, %v438
    %v440 = vadd.f32 %v434, %v438
    %vm441 = vcmp.gt.f32.partialorder %v439, 0.0
    %vm442 = vcmp.gt.f32.partialorder %v440, 0.0
    %v443 = vmin.f32 %v439, 0.0
    %v444 = vmin.f32 %v440, 0.0
    %v445 = vmul.f32 %v443, 1.442695
    %v446 = vpow.pop %v445
    %v447 = vmul.f32 %v444, 1.442695
    %v448 = vpow.pop %v447
    %v449 = vsub.f32 %v446, 1.0
    %v450 = vsub.f32 %v448, 1.0
    %v451 = vsel %vm441, %v439, %v449
    %v452 = vsel %vm442, %v440, %v450
    %v453 = vpack.c.bf16 %v452, %v451
    %v454 = vpack.c.bf16 %v37, %v36
    %v455 = vpack.c.bf16 %v39, %v38
    %v456 = vpack.c.bf16 %v40, %v40
    %vm457 = vcmask 293888
    %v459 = vsel %vm457, %v453, 0
    %vm461 = vcmask 1041408
    %v463 = vsel %vm461, %v456, 0
    %465 = vmatprep.subr.bf16.mxu0 0
    %466 = vmatpush1.bf16.msra.mxu0 0
    %467 = vmatprep.subr.bf16.mxu0 0
    %468 = vmatpush1.bf16.msra.mxu0 0
    %469 = vmatprep.subr.bf16.mxu0 0
    %470 = vmatpush1.bf16.msra.mxu0 0
    %471 = vmatprep.subr.bf16.mxu0 0
    %472 = vmatpush1.bf16.msra.mxu0 0
    %473 = vmatprep.subr.bf16.mxu0 0
    %474 = vmatpush1.bf16.msra.mxu0 0
    %475 = vmatprep.subr.bf16.mxu0 0
    %476 = vmatpush1.bf16.msra.mxu0 %v463
    %477 = vmatprep.subr.bf16.mxu0 0
    %478 = vmatpush1.bf16.msra.mxu0 %v455
    %479 = vmatprep.subr.bf16.mxu0 0
    %480 = vmatpush1.bf16.msra.mxu0 %v454
    %481 = vmatprep.subr.bf16.mxu0 0
    %482 = vmatpush2.bf16.msra.mxu0 0
    %483 = vmatprep.subr.bf16.mxu0 0
    %484 = vmatpush2.bf16.msra.mxu0 0
    %485 = vmatprep.subr.bf16.mxu0 0
    %486 = vmatpush2.bf16.msra.mxu0 0
    %487 = vmatprep.subr.bf16.mxu0 0
    %488 = vmatpush2.bf16.msra.mxu0 0
    %489 = vmatprep.subr.bf16.mxu0 0
    %490 = vmatpush2.bf16.msra.mxu0 0
    %491 = vmatprep.subr.bf16.mxu0 0
    %492 = vmatpush2.bf16.msra.mxu0 0
    %493 = vmatprep.subr.bf16.mxu0 0
    %494 = vmatpush2.bf16.msra.mxu0 0
    %495 = vmatprep.subr.bf16.mxu0 0
    %496 = vmatpush2.bf16.msra.mxu0 0
    %497 = vmatprep.mubr.bf16.mxu0 0
    %498 = vmatmul.mubr.bf16.gmra.mxu0 %v459
    %v499 = vpop.f32.mrf.mxu0
    %v500 = vadd.f32 0.0, %v499
    %v501 = vpop.f32.mrf.mxu0
    %v502 = vpop.f32.mrf.mxu0
    %v503 = vadd.f32 0.0, %v502
    %v504 = vpop.f32.mrf.mxu0
    %505 = vdwg.mxu0
    %508 = vrot.lane.b32.xlu0 %v500, 116
    %v509 = vpop.permute.xlu0 %508
    %510 = vrot.lane.b32.xlu0 %v503, 116
    %v511 = vpop.permute.xlu0 %510
    %514 = vxpose.xlu0.b32.start [1/16] %v509, 128
    %515 = vxpose.xlu0.b32.cont [2/16] %v511, 128
    %516 = vxpose.xlu0.b32.cont [3/16] 0.0, 128
    %517 = vxpose.xlu0.b32.cont [4/16] 0.0, 128
    %518 = vxpose.xlu0.b32.cont [5/16] 0.0, 128
    %519 = vxpose.xlu0.b32.cont [6/16] 0.0, 128
    %520 = vxpose.xlu0.b32.cont [7/16] 0.0, 128
    %521 = vxpose.xlu0.b32.cont [8/16] 0.0, 128
    %522 = vxpose.xlu0.b32.cont [9/16] 0.0, 128
    %523 = vxpose.xlu0.b32.cont [10/16] 0.0, 128
    %524 = vxpose.xlu0.b32.cont [11/16] 0.0, 128
    %525 = vxpose.xlu0.b32.cont [12/16] 0.0, 128
    %526 = vxpose.xlu0.b32.cont [13/16] 0.0, 128
    %527 = vxpose.xlu0.b32.cont [14/16] 0.0, 128
    %528 = vxpose.xlu0.b32.cont [15/16] 0.0, 128
    %529 = vxpose.xlu0.b32.end [16/16] 0.0, 128
    %v530 = vpop.trf.xlu0
    %v531 = vpop.trf.xlu0
    %v532 = vpop.trf.xlu0
    %v533 = vpop.trf.xlu0
    %v534 = vpop.trf.xlu0
    %v535 = vpop.trf.xlu0
    %v536 = vpop.trf.xlu0
    %v537 = vpop.trf.xlu0
    %v538 = vpop.trf.xlu0
    %v539 = vpop.trf.xlu0
    %v540 = vpop.trf.xlu0
    %v541 = vpop.trf.xlu0
    %v542 = vpop.trf.xlu0
    %v543 = vpop.trf.xlu0
    %v544 = vpop.trf.xlu0
    %v545 = vpop.trf.xlu0
    %v546 = vpack.c.bf16 %v503, %v500
    %547 = vset.pattern.permute.xlu0 15
    %548 = vperm.xlu0 %547, %v500
    %v549 = vpop.permute.xlu0 %548
    %551 = vset.pattern.permute.xlu0 15
    %552 = vperm.xlu0 %551, %v503
    %v553 = vpop.permute.xlu0 %552
    %v555 = vlaneseq
    %v556 = vshrl.u32 %v555, 7
    %v557 = vsub.s32 0, %v556
    %v558 = vrot.slane %v530, %v557
    %v559 = vadd.f32 %v549, %v558
    %v560 = vadd.f32 %v553, %v558
    %v561 = vmul.f32 %v559, 0.2
    %v562 = vmul.f32 %v560, 0.2
    %v563 = vmax.f32 %v559, %v561
    %v564 = vmax.f32 %v560, %v562
    %v565 = vsel %vm32, %v563, -1e+30
    %v566 = vsel %vm33, %v564, -1e+30
    %v567 = vsel %vm158, %v565, -inf
    %568 = vmax.xlane.f32.xlu0 %v567
    %v569 = vpop.xlane.xlu0 %568
    %v570 = vsel %vm158, %v566, -inf
    %571 = vmax.xlane.f32.xlu0 %v570
    %v572 = vpop.xlane.xlu0 %571
    %v573 = vsub.f32 %v565, %v569
    %v574 = vsub.f32 %v566, %v572
    %v575 = vmul.f32 %v573, 1.442695
    %v576 = vpow.pop %v575
    %v577 = vmul.f32 %v574, 1.442695
    %v578 = vpow.pop %v577
    %v579 = vmul.f32 %v576, %v30
    %v580 = vmul.f32 %v578, %v31
    %v581 = vsel %vm158, %v579, 0.0
    %582 = vadd.xlane.f32.xlu0 %v581
    %v583 = vpop.xlane.xlu0 %582
    %v584 = vsel %vm158, %v580, 0.0
    %585 = vadd.xlane.f32.xlu0 %v584
    %v586 = vpop.xlane.xlu0 %585
    %v587 = vrcp.pop %v583
    %v588 = vmul.f32 %v579, %v587
    %v589 = vrcp.pop %v586
    %v590 = vmul.f32 %v580, %v589
    %v591 = vpack.c.bf16 %v590, %v588
    %592 = vset.pattern.permute.xlu0 16
    %593 = vperm.xlu0 %592, %v500
    %v594 = vpop.permute.xlu0 %593
    %596 = vset.pattern.permute.xlu0 16
    %597 = vperm.xlu0 %596, %v503
    %v598 = vpop.permute.xlu0 %597
    %v600 = vlaneseq
    %v601 = vshrl.u32 %v600, 7
    %v602 = vsub.s32 1, %v601
    %v603 = vrot.slane %v530, %v602
    %v604 = vadd.f32 %v594, %v603
    %v605 = vadd.f32 %v598, %v603
    %v606 = vmul.f32 %v604, 0.2
    %v607 = vmul.f32 %v605, 0.2
    %v608 = vmax.f32 %v604, %v606
    %v609 = vmax.f32 %v605, %v607
    %v610 = vsel %vm32, %v608, -1e+30
    %v611 = vsel %vm33, %v609, -1e+30
    %v612 = vsel %vm158, %v610, -inf
    %613 = vmax.xlane.f32.xlu0 %v612
    %v614 = vpop.xlane.xlu0 %613
    %v615 = vsel %vm158, %v611, -inf
    %616 = vmax.xlane.f32.xlu0 %v615
    %v617 = vpop.xlane.xlu0 %616
    %v618 = vsub.f32 %v610, %v614
    %v619 = vsub.f32 %v611, %v617
    %v620 = vmul.f32 %v618, 1.442695
    %v621 = vpow.pop %v620
    %v622 = vmul.f32 %v619, 1.442695
    %v623 = vpow.pop %v622
    %v624 = vmul.f32 %v621, %v30
    %v625 = vmul.f32 %v623, %v31
    %v626 = vsel %vm158, %v624, 0.0
    %627 = vadd.xlane.f32.xlu0 %v626
    %v628 = vpop.xlane.xlu0 %627
    %v629 = vsel %vm158, %v625, 0.0
    %630 = vadd.xlane.f32.xlu0 %v629
    %v631 = vpop.xlane.xlu0 %630
    %v632 = vrcp.pop %v628
    %v633 = vmul.f32 %v624, %v632
    %v634 = vrcp.pop %v631
    %v635 = vmul.f32 %v625, %v634
    %v636 = vpack.c.bf16 %v635, %v633
    %638 = vrot.lane.b32.xlu0 %v546, 124
    %v639 = vpop.permute.xlu0 %638
    %v642 = vsel %vm158, %v636, 0
    %644 = vmatprep.subr.bf16.mxu0 0
    %645 = vmatpush1.bf16.msra.mxu0 0
    %646 = vmatprep.subr.bf16.mxu0 0
    %647 = vmatpush1.bf16.msra.mxu0 0
    %648 = vmatprep.subr.bf16.mxu0 0
    %649 = vmatpush1.bf16.msra.mxu0 0
    %650 = vmatprep.subr.bf16.mxu0 0
    %651 = vmatpush1.bf16.msra.mxu0 0
    %652 = vmatprep.subr.bf16.mxu0 0
    %653 = vmatpush1.bf16.msra.mxu0 0
    %654 = vmatprep.subr.bf16.mxu0 0
    %655 = vmatpush1.bf16.msra.mxu0 0
    %656 = vmatprep.subr.bf16.mxu0 0
    %657 = vmatpush1.bf16.msra.mxu0 0
    %658 = vmatprep.subr.bf16.mxu0 0
    %659 = vmatpush1.bf16.msra.mxu0 %v639
    %660 = vmatprep.subr.bf16.mxu0 0
    %661 = vmatpush2.bf16.msra.mxu0 0
    %662 = vmatprep.subr.bf16.mxu0 0
    %663 = vmatpush2.bf16.msra.mxu0 0
    %664 = vmatprep.subr.bf16.mxu0 0
    %665 = vmatpush2.bf16.msra.mxu0 0
    %666 = vmatprep.subr.bf16.mxu0 0
    %667 = vmatpush2.bf16.msra.mxu0 0
    %668 = vmatprep.subr.bf16.mxu0 0
    %669 = vmatpush2.bf16.msra.mxu0 0
    %670 = vmatprep.subr.bf16.mxu0 0
    %671 = vmatpush2.bf16.msra.mxu0 0
    %672 = vmatprep.subr.bf16.mxu0 0
    %673 = vmatpush2.bf16.msra.mxu0 0
    %674 = vmatprep.subr.bf16.mxu0 0
    %675 = vmatpush2.bf16.msra.mxu0 0
    %676 = vmatprep.mubr.bf16.mxu0 0
    %677 = vmatmul.mubr.bf16.gmra.mxu0 %v642
    %v678 = vpop.f32.mrf.mxu0
    %v679 = vadd.f32 0.0, %v678
    %v680 = vpop.f32.mrf.mxu0
    %v681 = vpop.f32.mrf.mxu0
    %v682 = vadd.f32 0.0, %v681
    %v683 = vpop.f32.mrf.mxu0
    %684 = vdwg.mxu0
    %685 = vset.pattern.permute.xlu0 17
    %686 = vperm.xlu0 %685, %v500
    %v687 = vpop.permute.xlu0 %686
    %689 = vset.pattern.permute.xlu0 17
    %690 = vperm.xlu0 %689, %v503
    %v691 = vpop.permute.xlu0 %690
    %v693 = vlaneseq
    %v694 = vshrl.u32 %v693, 7
    %v695 = vsub.s32 2, %v694
    %v696 = vrot.slane %v530, %v695
    %v697 = vadd.f32 %v687, %v696
    %v698 = vadd.f32 %v691, %v696
    %v699 = vmul.f32 %v697, 0.2
    %v700 = vmul.f32 %v698, 0.2
    %v701 = vmax.f32 %v697, %v699
    %v702 = vmax.f32 %v698, %v700
    %v703 = vsel %vm32, %v701, -1e+30
    %v704 = vsel %vm33, %v702, -1e+30
    %v705 = vsel %vm158, %v703, -inf
    %706 = vmax.xlane.f32.xlu0 %v705
    %v707 = vpop.xlane.xlu0 %706
    %v708 = vsel %vm158, %v704, -inf
    %709 = vmax.xlane.f32.xlu0 %v708
    %v710 = vpop.xlane.xlu0 %709
    %v711 = vsub.f32 %v703, %v707
    %v712 = vsub.f32 %v704, %v710
    %v713 = vmul.f32 %v711, 1.442695
    %v714 = vpow.pop %v713
    %v715 = vmul.f32 %v712, 1.442695
    %v716 = vpow.pop %v715
    %v717 = vmul.f32 %v714, %v30
    %v718 = vmul.f32 %v716, %v31
    %v719 = vsel %vm158, %v717, 0.0
    %720 = vadd.xlane.f32.xlu0 %v719
    %v721 = vpop.xlane.xlu0 %720
    %v722 = vsel %vm158, %v718, 0.0
    %723 = vadd.xlane.f32.xlu0 %v722
    %v724 = vpop.xlane.xlu0 %723
    %v725 = vrcp.pop %v721
    %v726 = vmul.f32 %v717, %v725
    %v727 = vrcp.pop %v724
    %v728 = vmul.f32 %v718, %v727
    %v729 = vpack.c.bf16 %v728, %v726
    %730 = vrot.lane.b32.xlu0 %v546, 120
    %v731 = vpop.permute.xlu0 %730
    %v734 = vsel %vm158, %v729, 0
    %736 = vmatprep.subr.bf16.mxu0 0
    %737 = vmatpush1.bf16.msra.mxu0 0
    %738 = vmatprep.subr.bf16.mxu0 0
    %739 = vmatpush1.bf16.msra.mxu0 0
    %740 = vmatprep.subr.bf16.mxu0 0
    %741 = vmatpush1.bf16.msra.mxu0 0
    %742 = vmatprep.subr.bf16.mxu0 0
    %743 = vmatpush1.bf16.msra.mxu0 0
    %744 = vmatprep.subr.bf16.mxu0 0
    %745 = vmatpush1.bf16.msra.mxu0 0
    %746 = vmatprep.subr.bf16.mxu0 0
    %747 = vmatpush1.bf16.msra.mxu0 0
    %748 = vmatprep.subr.bf16.mxu0 0
    %749 = vmatpush1.bf16.msra.mxu0 0
    %750 = vmatprep.subr.bf16.mxu0 0
    %751 = vmatpush1.bf16.msra.mxu0 %v731
    %752 = vmatprep.subr.bf16.mxu0 0
    %753 = vmatpush2.bf16.msra.mxu0 0
    %754 = vmatprep.subr.bf16.mxu0 0
    %755 = vmatpush2.bf16.msra.mxu0 0
    %756 = vmatprep.subr.bf16.mxu0 0
    %757 = vmatpush2.bf16.msra.mxu0 0
    %758 = vmatprep.subr.bf16.mxu0 0
    %759 = vmatpush2.bf16.msra.mxu0 0
    %760 = vmatprep.subr.bf16.mxu0 0
    %761 = vmatpush2.bf16.msra.mxu0 0
    %762 = vmatprep.subr.bf16.mxu0 0
    %763 = vmatpush2.bf16.msra.mxu0 0
    %764 = vmatprep.subr.bf16.mxu0 0
    %765 = vmatpush2.bf16.msra.mxu0 0
    %766 = vmatprep.subr.bf16.mxu0 0
    %767 = vmatpush2.bf16.msra.mxu0 0
    %768 = vmatprep.mubr.bf16.mxu0 0
    %769 = vmatmul.mubr.bf16.gmra.mxu0 %v734
    %v770 = vpop.f32.mrf.mxu0
    %v771 = vadd.f32 0.0, %v770
    %v772 = vpop.f32.mrf.mxu0
    %v773 = vpop.f32.mrf.mxu0
    %v774 = vadd.f32 0.0, %v773
    %v775 = vpop.f32.mrf.mxu0
    %776 = vdwg.mxu0
    %v778 = vsel %vm158, %v591, 0
    %780 = vmatprep.subr.bf16.mxu0 0
    %781 = vmatpush1.bf16.msra.mxu0 0
    %782 = vmatprep.subr.bf16.mxu0 0
    %783 = vmatpush1.bf16.msra.mxu0 0
    %784 = vmatprep.subr.bf16.mxu0 0
    %785 = vmatpush1.bf16.msra.mxu0 0
    %786 = vmatprep.subr.bf16.mxu0 0
    %787 = vmatpush1.bf16.msra.mxu0 0
    %788 = vmatprep.subr.bf16.mxu0 0
    %789 = vmatpush1.bf16.msra.mxu0 0
    %790 = vmatprep.subr.bf16.mxu0 0
    %791 = vmatpush1.bf16.msra.mxu0 0
    %792 = vmatprep.subr.bf16.mxu0 0
    %793 = vmatpush1.bf16.msra.mxu0 0
    %794 = vmatprep.subr.bf16.mxu0 0
    %795 = vmatpush1.bf16.msra.mxu0 %v546
    %796 = vmatprep.subr.bf16.mxu0 0
    %797 = vmatpush2.bf16.msra.mxu0 0
    %798 = vmatprep.subr.bf16.mxu0 0
    %799 = vmatpush2.bf16.msra.mxu0 0
    %800 = vmatprep.subr.bf16.mxu0 0
    %801 = vmatpush2.bf16.msra.mxu0 0
    %802 = vmatprep.subr.bf16.mxu0 0
    %803 = vmatpush2.bf16.msra.mxu0 0
    %804 = vmatprep.subr.bf16.mxu0 0
    %805 = vmatpush2.bf16.msra.mxu0 0
    %806 = vmatprep.subr.bf16.mxu0 0
    %807 = vmatpush2.bf16.msra.mxu0 0
    %808 = vmatprep.subr.bf16.mxu0 0
    %809 = vmatpush2.bf16.msra.mxu0 0
    %810 = vmatprep.subr.bf16.mxu0 0
    %811 = vmatpush2.bf16.msra.mxu0 0
    %812 = vmatprep.mubr.bf16.mxu0 0
    %813 = vmatmul.mubr.bf16.gmra.mxu0 %v778
    %v814 = vpop.f32.mrf.mxu0
    %v815 = vadd.f32 %v679, %v814
    %v816 = vpop.f32.mrf.mxu0
    %v817 = vpop.f32.mrf.mxu0
    %v818 = vadd.f32 %v682, %v817
    %v819 = vpop.f32.mrf.mxu0
    %820 = vdwg.mxu0
    %v821 = vadd.f32 %v815, %v771
    %v822 = vadd.f32 %v818, %v774
    %v823 = vmul.f32 %v821, 0.33333334
    %v824 = vmul.f32 %v822, 0.33333334
    %v825 = vlaneseq
    %v826 = vshrl.u32 %v825, 7
    %v827 = vsub.s32 0, %v826
    %v828 = vrot.slane %v41, %v827
    %v829 = vadd.f32 %v823, %v828
    %v830 = vadd.f32 %v824, %v828
    %832 = vset.pattern.permute.xlu0 0
    %833 = vperm.xlu0 %832, %v42
    %v834 = vpop.permute.xlu0 %833
    %837 = vset.pattern.permute.xlu0 0
    %838 = vperm.xlu0 %837, %v43
    %v839 = vpop.permute.xlu0 %838
    %v841 = vmul.f32 %v829, %v834
    %v842 = vmul.f32 %v830, %v839
    %vm843 = vcmask 31744
    %v844 = vsel %vm843, %v841, -inf
    %845 = vmax.xlane.f32.xlu0 %v844
    %v846 = vpop.xlane.xlu0 %845
    %v847 = vsel %vm843, %v842, -inf
    %848 = vmax.xlane.f32.xlu0 %v847
    %v849 = vpop.xlane.xlu0 %848
    %v850 = vsub.f32 %v841, %v846
    %v851 = vsub.f32 %v842, %v849
    %v852 = vmul.f32 %v850, 1.442695
    %v853 = vpow.pop %v852
    %v854 = vmul.f32 %v851, 1.442695
    %v855 = vpow.pop %v854
    %v856 = vsel %vm843, %v853, 0.0
    %857 = vadd.xlane.f32.xlu0 %v856
    %v858 = vpop.xlane.xlu0 %857
    %v859 = vsel %vm843, %v855, 0.0
    %860 = vadd.xlane.f32.xlu0 %v859
    %v861 = vpop.xlane.xlu0 %860
    %v862 = vlog2.pop %v858
    %v863 = vmul.f32 %v862, 0.6931472
    %v864 = vlog2.pop %v861
    %v865 = vmul.f32 %v864, 0.6931472
    %v866 = vsub.f32 %v850, %v863
    %v867 = vsub.f32 %v851, %v865
    %v868 = vsel %vm843, %v866, 0.0
    %v869 = vsel %vm843, %v867, 0.0
    %870 = vst [vmem:[#allocation5] sm:$0xff] %v868
    %871 = vst [vmem:[#allocation5 + $0x8] sm:$0xff] %v869
    // Predicated region
    $region18: #{tpu_custom_call.1} parent=1 // pred_check
      _
    $region19: #{tpu_custom_call.1} parent=1 // pred_check_branch
      %873 = sbr.rel (0) target = $region21
    $region20: #{tpu_custom_call.1} parent=1 // pred_region
      %s875 = ssub.s32 256, 256
      %876 = vsyncadd [#allocation4], %s875
      %s877 = sshll.u32 [#allocation5], 4
      %s878 = int_to_ptr.vmem [resolvable:$true] %s877
      %883 = dma.vmem_to_hbm [thread:$0]  %s878, 256, %s3, [#allocation4], 128, 128, 8
    $region21: #{tpu_custom_call.1} parent=1 // pred_fallthru
      _
    // Predicated region
    $region22: #{tpu_custom_call.1} parent=1 // pred_check
      _
    $region23: #{tpu_custom_call.1} parent=1 // pred_check_branch
      %885 = sbr.rel (0) target = $region25
    $region24: #{tpu_custom_call.1} parent=1 // pred_region
      %886 = dma.done [#allocation4], 256
    $region25: #{tpu_custom_call.1} parent=1 // pred_fallthru
      _
    %887 = vsyncpa [#allocation3], 1
    %888 = vsyncpa [#allocation4], 1

</llo_original>
